<compile_context>
chip_gen: v7x
topology: tpu7x:2x2x1
jax: 0.10.0
libtpu: 0.0.40
codegen_flags: <defaults>
</compile_context>

<pallas_src>
from functools import partial

import numpy as np
import jax
import jax.numpy as jnp
from jax import lax
from jax.experimental import pallas as pl
from jax.experimental.pallas import tpu as pltpu


_SEL_CAP_BYTES = 2 << 20        # cap for one copy of the packed-path selector
_BLOCK_TARGET_BYTES = 8 << 20   # per-step input-block target
_MIN_GRID_STEPS = 8             # keep ~8 grid steps when there is enough work


def _tpu_budget():
    """Return (vmem_budget_bytes, generation_tag); conservative when unknown."""
    try:
        kind = jax.devices()[0].device_kind.lower()
    except Exception:
        kind = ""
    if "v7" in kind or "7x" in kind:
        return 44 << 20, "v7x"      # 64 MiB physical VMEM per TensorCore
    if "v6" in kind:
        return 64 << 20, "v6e"      # 128 MiB physical
    if "v5 lite" in kind or "v5e" in kind or "v5lite" in kind:
        return 64 << 20, "v5e"      # 128 MiB physical
    if "v4" in kind or "v5" in kind:
        return 64 << 20, "other"    # v4 / v5p: 128 MiB physical
    return 32 << 20, "unknown"      # proven-safe default


def _round_up(x, m):
    return -(-x // m) * m


def _pick_bp(n_rows, per_row_in_bytes, per_row_total_bytes, sub, avail_bytes,
             min_steps):
    """Rows per grid step: ~8 MiB input block, VMEM-bounded, >= min_steps steps."""
    bp_tgt = max(sub, (_BLOCK_TARGET_BYTES // max(1, per_row_in_bytes)) // sub * sub)
    bp_vmem = max(sub, (avail_bytes // max(1, per_row_total_bytes)) // sub * sub)
    bp = min(bp_tgt, bp_vmem)
    if n_rows >= 2 * sub:
        # Split into >= min_steps steps (megacore split + DMA/compute overlap).
        bp_steps = max(sub, _round_up(-(-n_rows // max(1, min_steps)), sub))
        bp = min(bp, bp_steps)
    else:
        bp = min(bp, n_rows)        # block == full dim is always legal
    return max(1, bp)


def _pool_packed_kernel(m_ref, x_ref, o_ref, *, inv_area):
    # m_ref: (Kin, Kout) pre-scaled 0/1 selector; x_ref: (bp, Kin); o_ref: (bp, Kout)
    acc = jnp.dot(x_ref[...], m_ref[...], preferred_element_type=jnp.float32)
    if inv_area is not None:            # only when 1/scale^2 was not folded into M
        acc = acc * inv_area
    o_ref[...] = acc.astype(o_ref.dtype)


def _pool_wide_kernel(m_ref, x_ref, o_ref, *, scale, wb_in, w_total, needs_mask,
                      inv_area):
    # m_ref: (wb_in, wb_out); x_ref: (bp, scale, wb_in); o_ref: (bp, wb_out)
    if needs_mask:
        j = pl.program_id(1)
        col = lax.broadcasted_iota(jnp.int32, (o_ref.shape[0], wb_in), 1)
        valid = (j * wb_in + col) < w_total   # zero OOB garbage in the last W block
    acc = None
    for s in range(scale):                    # static unroll, scale is small
        xs = x_ref[:, s, :]
        if needs_mask:
            xs = jnp.where(valid, xs, jnp.zeros_like(xs))
        d = jnp.dot(xs, m_ref[...], preferred_element_type=jnp.float32)
        acc = d if acc is None else acc + d
    if inv_area is not None:
        acc = acc * inv_area
    o_ref[...] = acc.astype(o_ref.dtype)


def resize_down(x, scale=2):
    """Equivalent of nn.AvgPool2d((scale, scale), stride=(scale, scale), padding=0)."""
    assert scale >= 1
    N, C, H, W = x.shape
    if scale == 1:
        return x                                  # identity
    Ho, Wo = H // scale, W // scale
    assert Ho >= 1 and Wo >= 1, "input smaller than the pooling window"
    Hc = Ho * scale

    # H tail: PyTorch silently drops it.  Slicing H is a real copy in XLA.
    # TODO(synk): express the H-tail skip through the index_map (per-plane grid)
    # so ragged-H inputs avoid this extra HBM pass; the W tail is already dropped
    # for free via the selector / in-kernel mask.
    xc = x if Hc == H else x[:, :, :Hc, :]

    P = N * C
    total_out_rows = P * Ho
    vmem_budget, gen = _tpu_budget()

    x_isize = jnp.dtype(x.dtype).itemsize
    # Selector dtype: keep 16-bit float inputs in their own dtype on the HBM->VMEM
    # path (halves traffic; 0/1 * 2^-k is exact; MXU accumulates in f32).
    if x_isize == 2 and jnp.issubdtype(x.dtype, jnp.floating):
        m_dtype = x.dtype
    else:
        m_dtype = jnp.float32
    m_isize = jnp.dtype(m_dtype).itemsize
    sub = 16 if x_isize == 2 else 8               # sublane packing of the dtype

    inv_area = 1.0 / float(scale * scale)
    fold = (scale & (scale - 1)) == 0             # 1/scale^2 exact for pow2 scales
    sel_val = inv_area if fold else 1.0
    kern_inv = None if fold else inv_area

    # v5e + f32: cap output lanes at 128 so the selector-matmul FLOP inflation
    # (scale^2 * Kout MACs per output) does not make the MXU the binding unit.
    lane_cap = 128 if (gen == "v5e" and x_isize == 4) else 256

    # ---------------- packed (row-group) path ----------------
    use_packed = Wo <= lane_cap
    if use_packed:
        # gh = output image-rows packed per kernel row.  Prefer divisors of the
        # total output-row count making Kout = gh*Wo a multiple of 128 (unmasked
        # lane-dense stores, full MXU N); else largest divisor under the cap.
        d_max = min(total_out_rows, max(1, lane_cap // Wo))
        gh, gh_aligned = 1, 0
        for d in range(d_max, 0, -1):
            if total_out_rows % d:
                continue
            if (d * scale * W) * (d * Wo) * m_isize > _SEL_CAP_BYTES:
                continue
            if (d * Wo) % 128 == 0:
                gh_aligned = d
                break                              # descending -> largest aligned
            if gh == 1:
                gh = d                             # largest unaligned fallback
        gh = gh_aligned if gh_aligned else gh
        Kin, Kout = gh * scale * W, gh * Wo
        sel_bytes = Kin * Kout * m_isize
        if sel_bytes > _SEL_CAP_BYTES:
            use_packed = False                     # gh==1 selector too big -> wide

    if use_packed:
        Nrows = total_out_rows // gh
        x2d = xc.reshape(Nrows, Kin)               # metadata-only view

        # Selector (numpy -> baked compile-time constant, no per-call device work):
        # M[a*W + w, o*Wo + k] = sel_val iff a//scale == o and w//scale == k.
        # W-tail columns (w >= Wo*scale) match no k < Wo and stay zero.
        a = np.arange(gh * scale)
        w = np.arange(W)
        o = np.arange(gh)
        k = np.arange(Wo)
        m_np = ((a[:, None, None, None] // scale == o[None, None, :, None])
                & (w[None, :, None, None] // scale == k[None, None, None, :]))
        m = jnp.asarray(m_np.reshape(Kin, Kout).astype(np.float32) * sel_val,
                        dtype=m_dtype)

        # Budget: 2x in-block + 2x out-block + 2x selector + f32 result + headroom.
        per_row_in = Kin * x_isize
        per_row_tot = 2 * (Kin + Kout) * x_isize + Kout * 4
        avail = vmem_budget - 2 * sel_bytes - (2 << 20)
        bp = _pick_bp(Nrows, per_row_in, per_row_tot, sub, avail, _MIN_GRID_STEPS)
        grid_len = pl.cdiv(Nrows, bp)

        out2d = pl.pallas_call(
            partial(_pool_packed_kernel, inv_area=kern_inv),
            out_shape=jax.ShapeDtypeStruct((Nrows, Kout), x.dtype),
            grid_spec=pltpu.PrefetchScalarGridSpec(
                num_scalar_prefetch=0,
                grid=(grid_len,),
                in_specs=[
                    pl.BlockSpec((Kin, Kout), lambda i: (0, 0)),  # shared selector
                    pl.BlockSpec((bp, Kin), lambda i: (i, 0)),    # bp pooling rows
                ],
                out_specs=pl.BlockSpec((bp, Kout), lambda i: (i, 0)),
            ),
            compiler_params=pltpu.CompilerParams(
                dimension_semantics=("parallel",),
                vmem_limit_bytes=vmem_budget,
            ),
        )(m, x2d)
        return out2d.reshape(N, C, Ho, Wo)

    # ---------------- wide path: tile the output width ----------------
    wb_out = lane_cap                              # 128/256 output lanes per block
    wb_in = wb_out * scale                         # multiple of 128 -> legal minor
    Nrows = P * Ho
    x3d = xc.reshape(Nrows, scale, W)              # metadata-only view
    nwb = pl.cdiv(Wo, wb_out)
    needs_mask = (nwb * wb_in) > W                 # last width block reads past W

    c = np.arange(wb_in)
    kk = np.arange(wb_out)
    m = jnp.asarray((c[:, None] // scale == kk[None, :]).astype(np.float32) * sel_val,
                    dtype=m_dtype)
    sel_bytes = wb_in * wb_out * m_isize

    # Conservative VMEM accounting: the (bp, scale, wb_in) block may pad `scale`
    # sublanes up to a full tile.
    pad_sub = _round_up(scale, 8)
    per_row_in = pad_sub * wb_in * x_isize
    per_row_tot = 2 * per_row_in + 2 * wb_out * x_isize + wb_out * 4
    avail = vmem_budget - 2 * sel_bytes - (2 << 20)
    row_steps = max(1, -(-_MIN_GRID_STEPS // nwb))
    bp = _pick_bp(Nrows, per_row_in, per_row_tot, sub, avail, row_steps)
    grid = (pl.cdiv(Nrows, bp), nwb)

    out2d = pl.pallas_call(
        partial(_pool_wide_kernel, scale=scale, wb_in=wb_in, w_total=W,
                needs_mask=needs_mask, inv_area=kern_inv),
        out_shape=jax.ShapeDtypeStruct((Nrows, Wo), x.dtype),
        grid_spec=pltpu.PrefetchScalarGridSpec(
            num_scalar_prefetch=0,
            grid=grid,
            in_specs=[
                pl.BlockSpec((wb_in, wb_out), lambda i, j: (0, 0)),      # selector
                pl.BlockSpec((bp, scale, wb_in), lambda i, j: (i, 0, j)),
            ],
            out_specs=pl.BlockSpec((bp, wb_out), lambda i, j: (i, j)),
        ),
        compiler_params=pltpu.CompilerParams(
            dimension_semantics=("parallel", "parallel"),
            vmem_limit_bytes=vmem_budget,
        ),
    )(m, x3d)
    return out2d.reshape(N, C, Ho, Wo)


if __name__ == "__main__":
    key = jax.random.PRNGKey(0)
    k0, k1 = jax.random.split(key)

    N, C, H, W = 2, 4, 16, 16
    x = jax.random.normal(k0, (N, C, H, W), dtype=jnp.float32)

    # scale = 2 (packed / lane-aligned path)
    y = jax.block_until_ready(resize_down(x, scale=2))
    ref = x.reshape(N, C, H // 2, 2, W // 2, 2).mean(axis=(3, 5))
    assert y.shape == (N, C, H // 2, W // 2), y.shape
    assert jnp.allclose(y, ref, atol=1e-5, rtol=1e-5), "mismatch vs reference (scale=2)"

    # scale = 4 (different gh / block configuration)
    y4 = jax.block_until_ready(resize_down(x, scale=4))
    ref4 = x.reshape(N, C, H // 4, 4, W // 4, 4).mean(axis=(3, 5))
    assert y4.shape == (N, C, H // 4, W // 4), y4.shape
    assert jnp.allclose(y4, ref4, atol=1e-5, rtol=1e-5), "mismatch vs reference (scale=4)"

    # bf16 (exercises the bf16 selector and 16-sublane granularity)
    xb = x.astype(jnp.bfloat16)
    yb = jax.block_until_ready(resize_down(xb, scale=2))
    refb = xb.astype(jnp.float32).reshape(N, C, H // 2, 2, W // 2, 2).mean(axis=(3, 5))
    assert yb.dtype == jnp.bfloat16
    assert jnp.allclose(yb.astype(jnp.float32), refb, atol=2e-2, rtol=2e-2), \
        "mismatch vs reference (bf16)"

    # wide-Wo path (width-tiled) with a ragged W tail that PyTorch drops
    N2, C2, H2, W2, S2 = 1, 2, 6, 519, 2
    x2 = jax.random.normal(k1, (N2, C2, H2, W2), dtype=jnp.float32)
    y2 = jax.block_until_ready(resize_down(x2, scale=S2))
    Wo2 = W2 // S2
    ref2 = x2[:, :, :, :Wo2 * S2].reshape(N2, C2, H2 // S2, S2, Wo2, S2).mean(axis=(3, 5))
    assert y2.shape == (N2, C2, H2 // S2, Wo2), y2.shape
    assert jnp.allclose(y2, ref2, atol=1e-5, rtol=1e-5), "mismatch vs reference (wide)"

    print("KERNEL_OK")
</pallas_src>

<mosaic_0001>
module attributes {stable_mosaic.version = 11 : i64} {
  func.func @_pool_packed_kernel(%arg0: i32, %arg1: memref<1024x256xf32, #tpu.memory_space<vmem>>, %arg2: memref<2x1024xf32, #tpu.memory_space<vmem>>, %arg3: memref<2x256xf32, #tpu.memory_space<vmem>>) attributes {dimension_semantics = [#tpu.dimension_semantics<parallel>], iteration_bounds = array<i64: 1>, scalar_prefetch = 0 : i64, scratch_operands = 0 : i64, tpu.core_type = #tpu.core_type<tc>, window_params = [{pipeline_mode = #tpu.pipeline_mode<synchronous>, transform_indices = @transform_0, window_bounds = array<i64: 1024, 256>}, {transform_indices = @transform_1, window_bounds = array<i64: 2, 1024>}, {transform_indices = @transform_2, window_bounds = array<i64: 2, 256>}]} {
    %c0 = arith.constant 0 : index
    %c0_0 = arith.constant 0 : index
    %0 = vector.load %arg2[%c0, %c0_0] : memref<2x1024xf32, #tpu.memory_space<vmem>>, vector<2x1024xf32>
    %c0_1 = arith.constant 0 : index
    %c0_2 = arith.constant 0 : index
    %1 = vector.load %arg1[%c0_1, %c0_2] : memref<1024x256xf32, #tpu.memory_space<vmem>>, vector<1024x256xf32>
    %cst = arith.constant dense<0.000000e+00> : vector<2x256xf32>
    %2 = tpu.matmul %0, %1, %cst {dimension_numbers = #tpu.dot_dimension_numbers<[1], [0], [0], [1], [0, 0, 1, 1], [], []>} : vector<2x1024xf32>, vector<1024x256xf32>, vector<2x256xf32> -> vector<2x256xf32>
    %c0_3 = arith.constant 0 : index
    %c0_4 = arith.constant 0 : index
    %3 = vector.load %arg3[%c0_3, %c0_4] : memref<2x256xf32, #tpu.memory_space<vmem>>, vector<2x256xf32>
    tpu.vector_store %arg3[%c0_3, %c0_4], %2 {strides = array<i32>} : memref<2x256xf32, #tpu.memory_space<vmem>>, vector<2x256xf32>,
    return
  }
  func.func @transform_0(%arg0: i32) -> (i32, i32) {
    %c0_i32 = arith.constant 0 : i32
    %c0_i32_0 = arith.constant 0 : i32
    %c0_i32_1 = arith.constant 0 : i32
    return %c0_i32, %c0_i32_0 : i32, i32
  }
  func.func @transform_1(%arg0: i32) -> (i32, i32) {
    %c0_i32 = arith.constant 0 : i32
    %c0_i32_0 = arith.constant 0 : i32
    return %arg0, %c0_i32 : i32, i32
  }
  func.func @transform_2(%arg0: i32) -> (i32, i32) {
    %c0_i32 = arith.constant 0 : i32
    %c0_i32_0 = arith.constant 0 : i32
    return %arg0, %c0_i32 : i32, i32
  }
}

</mosaic_0001>

<llo_original>
// kernel: tpu_custom_call.1
$region0: #{tpu_custom_call.1}
  #allocation0 [shape = 'u32[]', space=smem, size = 0x4, offset = 0x4, fixed_abs, tag = 'smem constant byte address 0x4 - core index']
  #allocation1 [shape = 'u32[144,128]{1,0:T(1,128)}', space=vmem, size = 0x12000, scoped, tag = 'internal scratch']
  %s0 = inlined_call_operand.hbm [shape: f32[1024,256], index: 0, kind: input, shape index: {}]
  %s1 = inlined_call_operand.hbm [shape: f32[2,1024], index: 1, kind: input, shape index: {}]
  %s2 = inlined_call_operand.hbm [shape: f32[2,256], index: 2, kind: output, shape index: {}]
  %s3 = sld [smem:[#allocation0]]
  $region26: #{tpu_custom_call.1} parent=0
    _
  %s5 = ssub.s32 1, %s3
  %s6 = scalar_select 0, %s5, %s3
  $region1: #{tpu_custom_call.1} parent=0
    #allocation2 [shape = 'u8[1048576]{0}', space=vmem, size = 0x100000, scoped, tag = 'input window, operand 0, single buffered']
    #allocation3 [shape = 's32[1]{0}', space=sflag, size = 0x4, scoped, tag = 'scoped memory for tpu_custom_call.1']
    #allocation4 [shape = 's32[1]{0}', space=sflag, size = 0x4, scoped, tag = 'scoped memory for tpu_custom_call.1']
    #allocation5 [shape = 'u8[8192]{0}', space=vmem, size = 0x2000, scoped, tag = 'input window, operand 1, single buffered']
    #allocation6 [shape = 's32[1]{0}', space=sflag, size = 0x4, scoped, tag = 'scoped memory for tpu_custom_call.1']
    #allocation7 [shape = 'u8[2048]{0}', space=vmem, size = 0x800, scoped, tag = 'output window, operand 0, single buffered']
    %7 = vsyncpa [#allocation3], 0
    %8 = vsyncpa [#allocation6], 0
    %9 = vsyncpa [#allocation4], 0
    // Predicated region
    $region2: #{tpu_custom_call.1} parent=1 // pred_check
      _
    $region3: #{tpu_custom_call.1} parent=1 // pred_check_branch
      %11 = sbr.rel (0) target = $region5
    $region4: #{tpu_custom_call.1} parent=1 // pred_region
      %s13 = ssub.s32 32768, 32768
      %14 = vsyncadd [#allocation3], %s13
      %s15 = sshll.u32 [#allocation2], 4
      %s16 = int_to_ptr.vmem [resolvable:$true] %s15
      %21 = dma.hbm_to_vmem [thread:$0]  %s0, 32768, %s16, [#allocation3], 256, 256, 16
    $region5: #{tpu_custom_call.1} parent=1 // pred_fallthru
      _
    // Predicated region
    $region6: #{tpu_custom_call.1} parent=1 // pred_check
      _
    $region7: #{tpu_custom_call.1} parent=1 // pred_check_branch
      %23 = sbr.rel (0) target = $region9
    $region8: #{tpu_custom_call.1} parent=1 // pred_region
      %s25 = ssub.s32 256, 256
      %26 = vsyncadd [#allocation6], %s25
      %s28 = sshll.u32 [#allocation5], 4
      %s29 = int_to_ptr.vmem [resolvable:$true] %s28
      %31 = dma.hbm_to_vmem [thread:$0]  %s1, 256, %s29, [#allocation6]
    $region9: #{tpu_custom_call.1} parent=1 // pred_fallthru
      _
    // Predicated region
    $region10: #{tpu_custom_call.1} parent=1 // pred_check
      _
    $region11: #{tpu_custom_call.1} parent=1 // pred_check_branch
      %33 = sbr.rel (0) target = $region13
    $region12: #{tpu_custom_call.1} parent=1 // pred_region
      %34 = dma.done [#allocation3], 32768
    $region13: #{tpu_custom_call.1} parent=1 // pred_fallthru
      _
    // Predicated region
    $region14: #{tpu_custom_call.1} parent=1 // pred_check
      _
    $region15: #{tpu_custom_call.1} parent=1 // pred_check_branch
      %36 = sbr.rel (0) target = $region17
    $region16: #{tpu_custom_call.1} parent=1 // pred_region
      %37 = dma.done [#allocation6], 256
    $region17: #{tpu_custom_call.1} parent=1 // pred_fallthru
      _
    %v38 = vld [vmem:[#allocation5] sm:$0xff]
    %v39 = vld [vmem:[#allocation5 + $0x8] sm:$0xff]
    %v40 = vld [vmem:[#allocation2] sm:$0xff]
    %v41 = vld [vmem:[#allocation2 + $0x8] sm:$0xff]
    %v42 = vld [vmem:[#allocation2 + $0x10] sm:$0xff]
    %v43 = vld [vmem:[#allocation2 + $0x18] sm:$0xff]
    %v44 = vld [vmem:[#allocation2 + $0x20] sm:$0xff]
    %v45 = vld [vmem:[#allocation2 + $0x28] sm:$0xff]
    %v46 = vld [vmem:[#allocation2 + $0x30] sm:$0xff]
    %v47 = vld [vmem:[#allocation2 + $0x38] sm:$0xff]
    %v48 = vld [vmem:[#allocation2 + $0x40] sm:$0xff]
    %v49 = vld [vmem:[#allocation2 + $0x48] sm:$0xff]
    %v50 = vld [vmem:[#allocation2 + $0x50] sm:$0xff]
    %v51 = vld [vmem:[#allocation2 + $0x58] sm:$0xff]
    %v52 = vld [vmem:[#allocation2 + $0x60] sm:$0xff]
    %v53 = vld [vmem:[#allocation2 + $0x68] sm:$0xff]
    %v54 = vld [vmem:[#allocation2 + $0x70] sm:$0xff]
    %v55 = vld [vmem:[#allocation2 + $0x78] sm:$0xff]
    %v56 = vld [vmem:[#allocation2 + $0x80] sm:$0xff]
    %v57 = vld [vmem:[#allocation2 + $0x88] sm:$0xff]
    %v58 = vld [vmem:[#allocation2 + $0x90] sm:$0xff]
    %v59 = vld [vmem:[#allocation2 + $0x98] sm:$0xff]
    %v60 = vld [vmem:[#allocation2 + $0xa0] sm:$0xff]
    %v61 = vld [vmem:[#allocation2 + $0xa8] sm:$0xff]
    %v62 = vld [vmem:[#allocation2 + $0xb0] sm:$0xff]
    %v63 = vld [vmem:[#allocation2 + $0xb8] sm:$0xff]
    %v64 = vld [vmem:[#allocation2 + $0xc0] sm:$0xff]
    %v65 = vld [vmem:[#allocation2 + $0xc8] sm:$0xff]
    %v66 = vld [vmem:[#allocation2 + $0xd0] sm:$0xff]
    %v67 = vld [vmem:[#allocation2 + $0xd8] sm:$0xff]
    %v68 = vld [vmem:[#allocation2 + $0xe0] sm:$0xff]
    %v69 = vld [vmem:[#allocation2 + $0xe8] sm:$0xff]
    %v70 = vld [vmem:[#allocation2 + $0xf0] sm:$0xff]
    %v71 = vld [vmem:[#allocation2 + $0xf8] sm:$0xff]
    %v72 = vld [vmem:[#allocation2 + $0x100] sm:$0xff]
    %v73 = vld [vmem:[#allocation2 + $0x108] sm:$0xff]
    %v74 = vld [vmem:[#allocation2 + $0x110] sm:$0xff]
    %v75 = vld [vmem:[#allocation2 + $0x118] sm:$0xff]
    %v76 = vld [vmem:[#allocation2 + $0x120] sm:$0xff]
    %v77 = vld [vmem:[#allocation2 + $0x128] sm:$0xff]
    %v78 = vld [vmem:[#allocation2 + $0x130] sm:$0xff]
    %v79 = vld [vmem:[#allocation2 + $0x138] sm:$0xff]
    %v80 = vld [vmem:[#allocation2 + $0x140] sm:$0xff]
    %v81 = vld [vmem:[#allocation2 + $0x148] sm:$0xff]
    %v82 = vld [vmem:[#allocation2 + $0x150] sm:$0xff]
    %v83 = vld [vmem:[#allocation2 + $0x158] sm:$0xff]
    %v84 = vld [vmem:[#allocation2 + $0x160] sm:$0xff]
    %v85 = vld [vmem:[#allocation2 + $0x168] sm:$0xff]
    %v86 = vld [vmem:[#allocation2 + $0x170] sm:$0xff]
    %v87 = vld [vmem:[#allocation2 + $0x178] sm:$0xff]
    %v88 = vld [vmem:[#allocation2 + $0x180] sm:$0xff]
    %v89 = vld [vmem:[#allocation2 + $0x188] sm:$0xff]
    %v90 = vld [vmem:[#allocation2 + $0x190] sm:$0xff]
    %v91 = vld [vmem:[#allocation2 + $0x198] sm:$0xff]
    %v92 = vld [vmem:[#allocation2 + $0x1a0] sm:$0xff]
    %v93 = vld [vmem:[#allocation2 + $0x1a8] sm:$0xff]
    %v94 = vld [vmem:[#allocation2 + $0x1b0] sm:$0xff]
    %v95 = vld [vmem:[#allocation2 + $0x1b8] sm:$0xff]
    %v96 = vld [vmem:[#allocation2 + $0x1c0] sm:$0xff]
    %v97 = vld [vmem:[#allocation2 + $0x1c8] sm:$0xff]
    %v98 = vld [vmem:[#allocation2 + $0x1d0] sm:$0xff]
    %v99 = vld [vmem:[#allocation2 + $0x1d8] sm:$0xff]
    %v100 = vld [vmem:[#allocation2 + $0x1e0] sm:$0xff]
    %v101 = vld [vmem:[#allocation2 + $0x1e8] sm:$0xff]
    %v102 = vld [vmem:[#allocation2 + $0x1f0] sm:$0xff]
    %v103 = vld [vmem:[#allocation2 + $0x1f8] sm:$0xff]
    %v104 = vld [vmem:[#allocation2 + $0x200] sm:$0xff]
    %v105 = vld [vmem:[#allocation2 + $0x208] sm:$0xff]
    %v106 = vld [vmem:[#allocation2 + $0x210] sm:$0xff]
    %v107 = vld [vmem:[#allocation2 + $0x218] sm:$0xff]
    %v108 = vld [vmem:[#allocation2 + $0x220] sm:$0xff]
    %v109 = vld [vmem:[#allocation2 + $0x228] sm:$0xff]
    %v110 = vld [vmem:[#allocation2 + $0x230] sm:$0xff]
    %v111 = vld [vmem:[#allocation2 + $0x238] sm:$0xff]
    %v112 = vld [vmem:[#allocation2 + $0x240] sm:$0xff]
    %v113 = vld [vmem:[#allocation2 + $0x248] sm:$0xff]
    %v114 = vld [vmem:[#allocation2 + $0x250] sm:$0xff]
    %v115 = vld [vmem:[#allocation2 + $0x258] sm:$0xff]
    %v116 = vld [vmem:[#allocation2 + $0x260] sm:$0xff]
    %v117 = vld [vmem:[#allocation2 + $0x268] sm:$0xff]
    %v118 = vld [vmem:[#allocation2 + $0x270] sm:$0xff]
    %v119 = vld [vmem:[#allocation2 + $0x278] sm:$0xff]
    %v120 = vld [vmem:[#allocation2 + $0x280] sm:$0xff]
    %v121 = vld [vmem:[#allocation2 + $0x288] sm:$0xff]
    %v122 = vld [vmem:[#allocation2 + $0x290] sm:$0xff]
    %v123 = vld [vmem:[#allocation2 + $0x298] sm:$0xff]
    %v124 = vld [vmem:[#allocation2 + $0x2a0] sm:$0xff]
    %v125 = vld [vmem:[#allocation2 + $0x2a8] sm:$0xff]
    %v126 = vld [vmem:[#allocation2 + $0x2b0] sm:$0xff]
    %v127 = vld [vmem:[#allocation2 + $0x2b8] sm:$0xff]
    %v128 = vld [vmem:[#allocation2 + $0x2c0] sm:$0xff]
    %v129 = vld [vmem:[#allocation2 + $0x2c8] sm:$0xff]
    %v130 = vld [vmem:[#allocation2 + $0x2d0] sm:$0xff]
    %v131 = vld [vmem:[#allocation2 + $0x2d8] sm:$0xff]
    %v132 = vld [vmem:[#allocation2 + $0x2e0] sm:$0xff]
    %v133 = vld [vmem:[#allocation2 + $0x2e8] sm:$0xff]
    %v134 = vld [vmem:[#allocation2 + $0x2f0] sm:$0xff]
    %v135 = vld [vmem:[#allocation2 + $0x2f8] sm:$0xff]
    %v136 = vld [vmem:[#allocation2 + $0x300] sm:$0xff]
    %v137 = vld [vmem:[#allocation2 + $0x308] sm:$0xff]
    %v138 = vld [vmem:[#allocation2 + $0x310] sm:$0xff]
    %v139 = vld [vmem:[#allocation2 + $0x318] sm:$0xff]
    %v140 = vld [vmem:[#allocation2 + $0x320] sm:$0xff]
    %v141 = vld [vmem:[#allocation2 + $0x328] sm:$0xff]
    %v142 = vld [vmem:[#allocation2 + $0x330] sm:$0xff]
    %v143 = vld [vmem:[#allocation2 + $0x338] sm:$0xff]
    %v144 = vld [vmem:[#allocation2 + $0x340] sm:$0xff]
    %v145 = vld [vmem:[#allocation2 + $0x348] sm:$0xff]
    %v146 = vld [vmem:[#allocation2 + $0x350] sm:$0xff]
    %v147 = vld [vmem:[#allocation2 + $0x358] sm:$0xff]
    %v148 = vld [vmem:[#allocation2 + $0x360] sm:$0xff]
    %v149 = vld [vmem:[#allocation2 + $0x368] sm:$0xff]
    %v150 = vld [vmem:[#allocation2 + $0x370] sm:$0xff]
    %v151 = vld [vmem:[#allocation2 + $0x378] sm:$0xff]
    %v152 = vld [vmem:[#allocation2 + $0x380] sm:$0xff]
    %v153 = vld [vmem:[#allocation2 + $0x388] sm:$0xff]
    %v154 = vld [vmem:[#allocation2 + $0x390] sm:$0xff]
    %v155 = vld [vmem:[#allocation2 + $0x398] sm:$0xff]
    %v156 = vld [vmem:[#allocation2 + $0x3a0] sm:$0xff]
    %v157 = vld [vmem:[#allocation2 + $0x3a8] sm:$0xff]
    %v158 = vld [vmem:[#allocation2 + $0x3b0] sm:$0xff]
    %v159 = vld [vmem:[#allocation2 + $0x3b8] sm:$0xff]
    %v160 = vld [vmem:[#allocation2 + $0x3c0] sm:$0xff]
    %v161 = vld [vmem:[#allocation2 + $0x3c8] sm:$0xff]
    %v162 = vld [vmem:[#allocation2 + $0x3d0] sm:$0xff]
    %v163 = vld [vmem:[#allocation2 + $0x3d8] sm:$0xff]
    %v164 = vld [vmem:[#allocation2 + $0x3e0] sm:$0xff]
    %v165 = vld [vmem:[#allocation2 + $0x3e8] sm:$0xff]
    %v166 = vld [vmem:[#allocation2 + $0x3f0] sm:$0xff]
    %v167 = vld [vmem:[#allocation2 + $0x3f8] sm:$0xff]
    %v168 = vld [vmem:[#allocation2 + $0x400] sm:$0xff]
    %v169 = vld [vmem:[#allocation2 + $0x408] sm:$0xff]
    %v170 = vld [vmem:[#allocation2 + $0x410] sm:$0xff]
    %v171 = vld [vmem:[#allocation2 + $0x418] sm:$0xff]
    %v172 = vld [vmem:[#allocation2 + $0x420] sm:$0xff]
    %v173 = vld [vmem:[#allocation2 + $0x428] sm:$0xff]
    %v174 = vld [vmem:[#allocation2 + $0x430] sm:$0xff]
    %v175 = vld [vmem:[#allocation2 + $0x438] sm:$0xff]
    %v176 = vld [vmem:[#allocation2 + $0x440] sm:$0xff]
    %v177 = vld [vmem:[#allocation2 + $0x448] sm:$0xff]
    %v178 = vld [vmem:[#allocation2 + $0x450] sm:$0xff]
    %v179 = vld [vmem:[#allocation2 + $0x458] sm:$0xff]
    %v180 = vld [vmem:[#allocation2 + $0x460] sm:$0xff]
    %v181 = vld [vmem:[#allocation2 + $0x468] sm:$0xff]
    %v182 = vld [vmem:[#allocation2 + $0x470] sm:$0xff]
    %v183 = vld [vmem:[#allocation2 + $0x478] sm:$0xff]
    %v184 = vld [vmem:[#allocation2 + $0x480] sm:$0xff]
    %v185 = vld [vmem:[#allocation2 + $0x488] sm:$0xff]
    %v186 = vld [vmem:[#allocation2 + $0x490] sm:$0xff]
    %v187 = vld [vmem:[#allocation2 + $0x498] sm:$0xff]
    %v188 = vld [vmem:[#allocation2 + $0x4a0] sm:$0xff]
    %v189 = vld [vmem:[#allocation2 + $0x4a8] sm:$0xff]
    %v190 = vld [vmem:[#allocation2 + $0x4b0] sm:$0xff]
    %v191 = vld [vmem:[#allocation2 + $0x4b8] sm:$0xff]
    %v192 = vld [vmem:[#allocation2 + $0x4c0] sm:$0xff]
    %v193 = vld [vmem:[#allocation2 + $0x4c8] sm:$0xff]
    %v194 = vld [vmem:[#allocation2 + $0x4d0] sm:$0xff]
    %v195 = vld [vmem:[#allocation2 + $0x4d8] sm:$0xff]
    %v196 = vld [vmem:[#allocation2 + $0x4e0] sm:$0xff]
    %v197 = vld [vmem:[#allocation2 + $0x4e8] sm:$0xff]
    %v198 = vld [vmem:[#allocation2 + $0x4f0] sm:$0xff]
    %v199 = vld [vmem:[#allocation2 + $0x4f8] sm:$0xff]
    %v200 = vld [vmem:[#allocation2 + $0x500] sm:$0xff]
    %v201 = vld [vmem:[#allocation2 + $0x508] sm:$0xff]
    %v202 = vld [vmem:[#allocation2 + $0x510] sm:$0xff]
    %v203 = vld [vmem:[#allocation2 + $0x518] sm:$0xff]
    %v204 = vld [vmem:[#allocation2 + $0x520] sm:$0xff]
    %v205 = vld [vmem:[#allocation2 + $0x528] sm:$0xff]
    %v206 = vld [vmem:[#allocation2 + $0x530] sm:$0xff]
    %v207 = vld [vmem:[#allocation2 + $0x538] sm:$0xff]
    %v208 = vld [vmem:[#allocation2 + $0x540] sm:$0xff]
    %v209 = vld [vmem:[#allocation2 + $0x548] sm:$0xff]
    %v210 = vld [vmem:[#allocation2 + $0x550] sm:$0xff]
    %v211 = vld [vmem:[#allocation2 + $0x558] sm:$0xff]
    %v212 = vld [vmem:[#allocation2 + $0x560] sm:$0xff]
    %v213 = vld [vmem:[#allocation2 + $0x568] sm:$0xff]
    %v214 = vld [vmem:[#allocation2 + $0x570] sm:$0xff]
    %v215 = vld [vmem:[#allocation2 + $0x578] sm:$0xff]
    %v216 = vld [vmem:[#allocation2 + $0x580] sm:$0xff]
    %v217 = vld [vmem:[#allocation2 + $0x588] sm:$0xff]
    %v218 = vld [vmem:[#allocation2 + $0x590] sm:$0xff]
    %v219 = vld [vmem:[#allocation2 + $0x598] sm:$0xff]
    %v220 = vld [vmem:[#allocation2 + $0x5a0] sm:$0xff]
    %v221 = vld [vmem:[#allocation2 + $0x5a8] sm:$0xff]
    %v222 = vld [vmem:[#allocation2 + $0x5b0] sm:$0xff]
    %v223 = vld [vmem:[#allocation2 + $0x5b8] sm:$0xff]
    %v224 = vld [vmem:[#allocation2 + $0x5c0] sm:$0xff]
    %v225 = vld [vmem:[#allocation2 + $0x5c8] sm:$0xff]
    %v226 = vld [vmem:[#allocation2 + $0x5d0] sm:$0xff]
    %v227 = vld [vmem:[#allocation2 + $0x5d8] sm:$0xff]
    %v228 = vld [vmem:[#allocation2 + $0x5e0] sm:$0xff]
    %v229 = vld [vmem:[#allocation2 + $0x5e8] sm:$0xff]
    %v230 = vld [vmem:[#allocation2 + $0x5f0] sm:$0xff]
    %v231 = vld [vmem:[#allocation2 + $0x5f8] sm:$0xff]
    %v232 = vld [vmem:[#allocation2 + $0x600] sm:$0xff]
    %v233 = vld [vmem:[#allocation2 + $0x608] sm:$0xff]
    %v234 = vld [vmem:[#allocation2 + $0x610] sm:$0xff]
    %v235 = vld [vmem:[#allocation2 + $0x618] sm:$0xff]
    %v236 = vld [vmem:[#allocation2 + $0x620] sm:$0xff]
    %v237 = vld [vmem:[#allocation2 + $0x628] sm:$0xff]
    %v238 = vld [vmem:[#allocation2 + $0x630] sm:$0xff]
    %v239 = vld [vmem:[#allocation2 + $0x638] sm:$0xff]
    %v240 = vld [vmem:[#allocation2 + $0x640] sm:$0xff]
    %v241 = vld [vmem:[#allocation2 + $0x648] sm:$0xff]
    %v242 = vld [vmem:[#allocation2 + $0x650] sm:$0xff]
    %v243 = vld [vmem:[#allocation2 + $0x658] sm:$0xff]
    %v244 = vld [vmem:[#allocation2 + $0x660] sm:$0xff]
    %v245 = vld [vmem:[#allocation2 + $0x668] sm:$0xff]
    %v246 = vld [vmem:[#allocation2 + $0x670] sm:$0xff]
    %v247 = vld [vmem:[#allocation2 + $0x678] sm:$0xff]
    %v248 = vld [vmem:[#allocation2 + $0x680] sm:$0xff]
    %v249 = vld [vmem:[#allocation2 + $0x688] sm:$0xff]
    %v250 = vld [vmem:[#allocation2 + $0x690] sm:$0xff]
    %v251 = vld [vmem:[#allocation2 + $0x698] sm:$0xff]
    %v252 = vld [vmem:[#allocation2 + $0x6a0] sm:$0xff]
    %v253 = vld [vmem:[#allocation2 + $0x6a8] sm:$0xff]
    %v254 = vld [vmem:[#allocation2 + $0x6b0] sm:$0xff]
    %v255 = vld [vmem:[#allocation2 + $0x6b8] sm:$0xff]
    %v256 = vld [vmem:[#allocation2 + $0x6c0] sm:$0xff]
    %v257 = vld [vmem:[#allocation2 + $0x6c8] sm:$0xff]
    %v258 = vld [vmem:[#allocation2 + $0x6d0] sm:$0xff]
    %v259 = vld [vmem:[#allocation2 + $0x6d8] sm:$0xff]
    %v260 = vld [vmem:[#allocation2 + $0x6e0] sm:$0xff]
    %v261 = vld [vmem:[#allocation2 + $0x6e8] sm:$0xff]
    %v262 = vld [vmem:[#allocation2 + $0x6f0] sm:$0xff]
    %v263 = vld [vmem:[#allocation2 + $0x6f8] sm:$0xff]
    %v264 = vld [vmem:[#allocation2 + $0x700] sm:$0xff]
    %v265 = vld [vmem:[#allocation2 + $0x708] sm:$0xff]
    %v266 = vld [vmem:[#allocation2 + $0x710] sm:$0xff]
    %v267 = vld [vmem:[#allocation2 + $0x718] sm:$0xff]
    %v268 = vld [vmem:[#allocation2 + $0x720] sm:$0xff]
    %v269 = vld [vmem:[#allocation2 + $0x728] sm:$0xff]
    %v270 = vld [vmem:[#allocation2 + $0x730] sm:$0xff]
    %v271 = vld [vmem:[#allocation2 + $0x738] sm:$0xff]
    %v272 = vld [vmem:[#allocation2 + $0x740] sm:$0xff]
    %v273 = vld [vmem:[#allocation2 + $0x748] sm:$0xff]
    %v274 = vld [vmem:[#allocation2 + $0x750] sm:$0xff]
    %v275 = vld [vmem:[#allocation2 + $0x758] sm:$0xff]
    %v276 = vld [vmem:[#allocation2 + $0x760] sm:$0xff]
    %v277 = vld [vmem:[#allocation2 + $0x768] sm:$0xff]
    %v278 = vld [vmem:[#allocation2 + $0x770] sm:$0xff]
    %v279 = vld [vmem:[#allocation2 + $0x778] sm:$0xff]
    %v280 = vld [vmem:[#allocation2 + $0x780] sm:$0xff]
    %v281 = vld [vmem:[#allocation2 + $0x788] sm:$0xff]
    %v282 = vld [vmem:[#allocation2 + $0x790] sm:$0xff]
    %v283 = vld [vmem:[#allocation2 + $0x798] sm:$0xff]
    %v284 = vld [vmem:[#allocation2 + $0x7a0] sm:$0xff]
    %v285 = vld [vmem:[#allocation2 + $0x7a8] sm:$0xff]
    %v286 = vld [vmem:[#allocation2 + $0x7b0] sm:$0xff]
    %v287 = vld [vmem:[#allocation2 + $0x7b8] sm:$0xff]
    %v288 = vld [vmem:[#allocation2 + $0x7c0] sm:$0xff]
    %v289 = vld [vmem:[#allocation2 + $0x7c8] sm:$0xff]
    %v290 = vld [vmem:[#allocation2 + $0x7d0] sm:$0xff]
    %v291 = vld [vmem:[#allocation2 + $0x7d8] sm:$0xff]
    %v292 = vld [vmem:[#allocation2 + $0x7e0] sm:$0xff]
    %v293 = vld [vmem:[#allocation2 + $0x7e8] sm:$0xff]
    %v294 = vld [vmem:[#allocation2 + $0x7f0] sm:$0xff]
    %v295 = vld [vmem:[#allocation2 + $0x7f8] sm:$0xff]
    %v298 = vcombine.high %v38, %v38
    %v300 = vunpack.c.l.s4 1983009808
    %v301 = vunpack.c.0.s8 %v300
    %v302 = vlaneseq
    %v303 = vshrl.u32 %v302, 7
    %v304 = vsub.s32 %v301, %v303
    %v305 = vrot.slane %v38, %v304
    %v307 = vunpack.c.l.s4 1983009808
    %v308 = vunpack.c.0.s8 %v307
    %v309 = vlaneseq
    %v310 = vshrl.u32 %v309, 7
    %v311 = vsub.s32 %v308, %v310
    %v312 = vrot.slane %v298, %v311
    %v313 = vcombine.high %v305, %v305
    %v314 = vcombine.high %v312, %v312
    %v315 = vcombine.high %v39, %v39
    %v317 = vunpack.c.l.s4 1983009808
    %v318 = vunpack.c.0.s8 %v317
    %v319 = vlaneseq
    %v320 = vshrl.u32 %v319, 7
    %v321 = vsub.s32 %v318, %v320
    %v322 = vrot.slane %v39, %v321
    %v324 = vunpack.c.l.s4 1983009808
    %v325 = vunpack.c.0.s8 %v324
    %v326 = vlaneseq
    %v327 = vshrl.u32 %v326, 7
    %v328 = vsub.s32 %v325, %v327
    %v329 = vrot.slane %v315, %v328
    %v330 = vcombine.high %v322, %v322
    %v331 = vcombine.high %v329, %v329
    %340 = vmatprep.subr.mxu0 %v41
    %341 = vmatpush1.msra.mxu0 %v40
    %342 = vmatprep.subr.mxu0 %v43
    %343 = vmatpush1.msra.mxu0 %v42
    %344 = vmatprep.subr.mxu0 %v45
    %345 = vmatpush1.msra.mxu0 %v44
    %346 = vmatprep.subr.mxu0 %v47
    %347 = vmatpush1.msra.mxu0 %v46
    %348 = vmatprep.subr.mxu0 %v49
    %349 = vmatpush1.msra.mxu0 %v48
    %350 = vmatprep.subr.mxu0 %v51
    %351 = vmatpush1.msra.mxu0 %v50
    %352 = vmatprep.subr.mxu0 %v53
    %353 = vmatpush1.msra.mxu0 %v52
    %354 = vmatprep.subr.mxu0 %v55
    %355 = vmatpush1.msra.mxu0 %v54
    %356 = vmatprep.subr.mxu0 %v57
    %357 = vmatpush1.msra.mxu0 %v56
    %358 = vmatprep.subr.mxu0 %v59
    %359 = vmatpush1.msra.mxu0 %v58
    %360 = vmatprep.subr.mxu0 %v61
    %361 = vmatpush1.msra.mxu0 %v60
    %362 = vmatprep.subr.mxu0 %v63
    %363 = vmatpush1.msra.mxu0 %v62
    %364 = vmatprep.subr.mxu0 %v65
    %365 = vmatpush1.msra.mxu0 %v64
    %366 = vmatprep.subr.mxu0 %v67
    %367 = vmatpush1.msra.mxu0 %v66
    %368 = vmatprep.subr.mxu0 %v69
    %369 = vmatpush1.msra.mxu0 %v68
    %370 = vmatprep.subr.mxu0 %v71
    %371 = vmatpush1.msra.mxu0 %v70
    %372 = vmatprep.subr.mxu0 %v73
    %373 = vmatpush1.msra.mxu0 %v72
    %374 = vmatprep.subr.mxu0 %v75
    %375 = vmatpush1.msra.mxu0 %v74
    %376 = vmatprep.subr.mxu0 %v77
    %377 = vmatpush1.msra.mxu0 %v76
    %378 = vmatprep.subr.mxu0 %v79
    %379 = vmatpush1.msra.mxu0 %v78
    %380 = vmatprep.subr.mxu0 %v81
    %381 = vmatpush1.msra.mxu0 %v80
    %382 = vmatprep.subr.mxu0 %v83
    %383 = vmatpush1.msra.mxu0 %v82
    %384 = vmatprep.subr.mxu0 %v85
    %385 = vmatpush1.msra.mxu0 %v84
    %386 = vmatprep.subr.mxu0 %v87
    %387 = vmatpush1.msra.mxu0 %v86
    %388 = vmatprep.subr.mxu0 %v89
    %389 = vmatpush1.msra.mxu0 %v88
    %390 = vmatprep.subr.mxu0 %v91
    %391 = vmatpush1.msra.mxu0 %v90
    %392 = vmatprep.subr.mxu0 %v93
    %393 = vmatpush1.msra.mxu0 %v92
    %394 = vmatprep.subr.mxu0 %v95
    %395 = vmatpush1.msra.mxu0 %v94
    %396 = vmatprep.subr.mxu0 %v97
    %397 = vmatpush1.msra.mxu0 %v96
    %398 = vmatprep.subr.mxu0 %v99
    %399 = vmatpush1.msra.mxu0 %v98
    %400 = vmatprep.subr.mxu0 %v101
    %401 = vmatpush1.msra.mxu0 %v100
    %402 = vmatprep.subr.mxu0 %v103
    %403 = vmatpush1.msra.mxu0 %v102
    %404 = vmatprep.mubr.f32.mxu0 %v313
    %405 = vmatmul.mubr.f32.gmra.mrb[0].mxu0 %v305
    %v406 = vpop.f32.mrb[0].mxu0
    %v407 = vadd.f32 0.0, %v406
    %v408 = vpop.f32.mrb[0].mxu0
    %v409 = vadd.f32 0.0, %v408
    %410 = vdwg.mxu0
    %411 = vmatprep.subr.mxu0 %v105
    %412 = vmatpush1.msra.mxu0 %v104
    %413 = vmatprep.subr.mxu0 %v107
    %414 = vmatpush1.msra.mxu0 %v106
    %415 = vmatprep.subr.mxu0 %v109
    %416 = vmatpush1.msra.mxu0 %v108
    %417 = vmatprep.subr.mxu0 %v111
    %418 = vmatpush1.msra.mxu0 %v110
    %419 = vmatprep.subr.mxu0 %v113
    %420 = vmatpush1.msra.mxu0 %v112
    %421 = vmatprep.subr.mxu0 %v115
    %422 = vmatpush1.msra.mxu0 %v114
    %423 = vmatprep.subr.mxu0 %v117
    %424 = vmatpush1.msra.mxu0 %v116
    %425 = vmatprep.subr.mxu0 %v119
    %426 = vmatpush1.msra.mxu0 %v118
    %427 = vmatprep.subr.mxu0 %v121
    %428 = vmatpush1.msra.mxu0 %v120
    %429 = vmatprep.subr.mxu0 %v123
    %430 = vmatpush1.msra.mxu0 %v122
    %431 = vmatprep.subr.mxu0 %v125
    %432 = vmatpush1.msra.mxu0 %v124
    %433 = vmatprep.subr.mxu0 %v127
    %434 = vmatpush1.msra.mxu0 %v126
    %435 = vmatprep.subr.mxu0 %v129
    %436 = vmatpush1.msra.mxu0 %v128
    %437 = vmatprep.subr.mxu0 %v131
    %438 = vmatpush1.msra.mxu0 %v130
    %439 = vmatprep.subr.mxu0 %v133
    %440 = vmatpush1.msra.mxu0 %v132
    %441 = vmatprep.subr.mxu0 %v135
    %442 = vmatpush1.msra.mxu0 %v134
    %443 = vmatprep.subr.mxu0 %v137
    %444 = vmatpush1.msra.mxu0 %v136
    %445 = vmatprep.subr.mxu0 %v139
    %446 = vmatpush1.msra.mxu0 %v138
    %447 = vmatprep.subr.mxu0 %v141
    %448 = vmatpush1.msra.mxu0 %v140
    %449 = vmatprep.subr.mxu0 %v143
    %450 = vmatpush1.msra.mxu0 %v142
    %451 = vmatprep.subr.mxu0 %v145
    %452 = vmatpush1.msra.mxu0 %v144
    %453 = vmatprep.subr.mxu0 %v147
    %454 = vmatpush1.msra.mxu0 %v146
    %455 = vmatprep.subr.mxu0 %v149
    %456 = vmatpush1.msra.mxu0 %v148
    %457 = vmatprep.subr.mxu0 %v151
    %458 = vmatpush1.msra.mxu0 %v150
    %459 = vmatprep.subr.mxu0 %v153
    %460 = vmatpush1.msra.mxu0 %v152
    %461 = vmatprep.subr.mxu0 %v155
    %462 = vmatpush1.msra.mxu0 %v154
    %463 = vmatprep.subr.mxu0 %v157
    %464 = vmatpush1.msra.mxu0 %v156
    %465 = vmatprep.subr.mxu0 %v159
    %466 = vmatpush1.msra.mxu0 %v158
    %467 = vmatprep.subr.mxu0 %v161
    %468 = vmatpush1.msra.mxu0 %v160
    %469 = vmatprep.subr.mxu0 %v163
    %470 = vmatpush1.msra.mxu0 %v162
    %471 = vmatprep.subr.mxu0 %v165
    %472 = vmatpush1.msra.mxu0 %v164
    %473 = vmatprep.subr.mxu0 %v167
    %474 = vmatpush1.msra.mxu0 %v166
    %475 = vmatprep.mubr.f32.mxu0 %v314
    %476 = vmatmul.mubr.f32.gmra.mrb[0].mxu0 %v312
    %v477 = vpop.f32.mrb[0].mxu0
    %v478 = vadd.f32 %v407, %v477
    %v479 = vpop.f32.mrb[0].mxu0
    %v480 = vadd.f32 %v409, %v479
    %481 = vdwg.mxu0
    %482 = vmatprep.subr.mxu0 %v169
    %483 = vmatpush1.msra.mxu0 %v168
    %484 = vmatprep.subr.mxu0 %v171
    %485 = vmatpush1.msra.mxu0 %v170
    %486 = vmatprep.subr.mxu0 %v173
    %487 = vmatpush1.msra.mxu0 %v172
    %488 = vmatprep.subr.mxu0 %v175
    %489 = vmatpush1.msra.mxu0 %v174
    %490 = vmatprep.subr.mxu0 %v177
    %491 = vmatpush1.msra.mxu0 %v176
    %492 = vmatprep.subr.mxu0 %v179
    %493 = vmatpush1.msra.mxu0 %v178
    %494 = vmatprep.subr.mxu0 %v181
    %495 = vmatpush1.msra.mxu0 %v180
    %496 = vmatprep.subr.mxu0 %v183
    %497 = vmatpush1.msra.mxu0 %v182
    %498 = vmatprep.subr.mxu0 %v185
    %499 = vmatpush1.msra.mxu0 %v184
    %500 = vmatprep.subr.mxu0 %v187
    %501 = vmatpush1.msra.mxu0 %v186
    %502 = vmatprep.subr.mxu0 %v189
    %503 = vmatpush1.msra.mxu0 %v188
    %504 = vmatprep.subr.mxu0 %v191
    %505 = vmatpush1.msra.mxu0 %v190
    %506 = vmatprep.subr.mxu0 %v193
    %507 = vmatpush1.msra.mxu0 %v192
    %508 = vmatprep.subr.mxu0 %v195
    %509 = vmatpush1.msra.mxu0 %v194
    %510 = vmatprep.subr.mxu0 %v197
    %511 = vmatpush1.msra.mxu0 %v196
    %512 = vmatprep.subr.mxu0 %v199
    %513 = vmatpush1.msra.mxu0 %v198
    %514 = vmatprep.subr.mxu0 %v201
    %515 = vmatpush1.msra.mxu0 %v200
    %516 = vmatprep.subr.mxu0 %v203
    %517 = vmatpush1.msra.mxu0 %v202
    %518 = vmatprep.subr.mxu0 %v205
    %519 = vmatpush1.msra.mxu0 %v204
    %520 = vmatprep.subr.mxu0 %v207
    %521 = vmatpush1.msra.mxu0 %v206
    %522 = vmatprep.subr.mxu0 %v209
    %523 = vmatpush1.msra.mxu0 %v208
    %524 = vmatprep.subr.mxu0 %v211
    %525 = vmatpush1.msra.mxu0 %v210
    %526 = vmatprep.subr.mxu0 %v213
    %527 = vmatpush1.msra.mxu0 %v212
    %528 = vmatprep.subr.mxu0 %v215
    %529 = vmatpush1.msra.mxu0 %v214
    %530 = vmatprep.subr.mxu0 %v217
    %531 = vmatpush1.msra.mxu0 %v216
    %532 = vmatprep.subr.mxu0 %v219
    %533 = vmatpush1.msra.mxu0 %v218
    %534 = vmatprep.subr.mxu0 %v221
    %535 = vmatpush1.msra.mxu0 %v220
    %536 = vmatprep.subr.mxu0 %v223
    %537 = vmatpush1.msra.mxu0 %v222
    %538 = vmatprep.subr.mxu0 %v225
    %539 = vmatpush1.msra.mxu0 %v224
    %540 = vmatprep.subr.mxu0 %v227
    %541 = vmatpush1.msra.mxu0 %v226
    %542 = vmatprep.subr.mxu0 %v229
    %543 = vmatpush1.msra.mxu0 %v228
    %544 = vmatprep.subr.mxu0 %v231
    %545 = vmatpush1.msra.mxu0 %v230
    %546 = vmatprep.mubr.f32.mxu0 %v330
    %547 = vmatmul.mubr.f32.gmra.mrb[0].mxu0 %v322
    %v548 = vpop.f32.mrb[0].mxu0
    %v549 = vadd.f32 %v478, %v548
    %v550 = vpop.f32.mrb[0].mxu0
    %v551 = vadd.f32 %v480, %v550
    %552 = vdwg.mxu0
    %553 = vmatprep.subr.mxu0 %v233
    %554 = vmatpush1.msra.mxu0 %v232
    %555 = vmatprep.subr.mxu0 %v235
    %556 = vmatpush1.msra.mxu0 %v234
    %557 = vmatprep.subr.mxu0 %v237
    %558 = vmatpush1.msra.mxu0 %v236
    %559 = vmatprep.subr.mxu0 %v239
    %560 = vmatpush1.msra.mxu0 %v238
    %561 = vmatprep.subr.mxu0 %v241
    %562 = vmatpush1.msra.mxu0 %v240
    %563 = vmatprep.subr.mxu0 %v243
    %564 = vmatpush1.msra.mxu0 %v242
    %565 = vmatprep.subr.mxu0 %v245
    %566 = vmatpush1.msra.mxu0 %v244
    %567 = vmatprep.subr.mxu0 %v247
    %568 = vmatpush1.msra.mxu0 %v246
    %569 = vmatprep.subr.mxu0 %v249
    %570 = vmatpush1.msra.mxu0 %v248
    %571 = vmatprep.subr.mxu0 %v251
    %572 = vmatpush1.msra.mxu0 %v250
    %573 = vmatprep.subr.mxu0 %v253
    %574 = vmatpush1.msra.mxu0 %v252
    %575 = vmatprep.subr.mxu0 %v255
    %576 = vmatpush1.msra.mxu0 %v254
    %577 = vmatprep.subr.mxu0 %v257
    %578 = vmatpush1.msra.mxu0 %v256
    %579 = vmatprep.subr.mxu0 %v259
    %580 = vmatpush1.msra.mxu0 %v258
    %581 = vmatprep.subr.mxu0 %v261
    %582 = vmatpush1.msra.mxu0 %v260
    %583 = vmatprep.subr.mxu0 %v263
    %584 = vmatpush1.msra.mxu0 %v262
    %585 = vmatprep.subr.mxu0 %v265
    %586 = vmatpush1.msra.mxu0 %v264
    %587 = vmatprep.subr.mxu0 %v267
    %588 = vmatpush1.msra.mxu0 %v266
    %589 = vmatprep.subr.mxu0 %v269
    %590 = vmatpush1.msra.mxu0 %v268
    %591 = vmatprep.subr.mxu0 %v271
    %592 = vmatpush1.msra.mxu0 %v270
    %593 = vmatprep.subr.mxu0 %v273
    %594 = vmatpush1.msra.mxu0 %v272
    %595 = vmatprep.subr.mxu0 %v275
    %596 = vmatpush1.msra.mxu0 %v274
    %597 = vmatprep.subr.mxu0 %v277
    %598 = vmatpush1.msra.mxu0 %v276
    %599 = vmatprep.subr.mxu0 %v279
    %600 = vmatpush1.msra.mxu0 %v278
    %601 = vmatprep.subr.mxu0 %v281
    %602 = vmatpush1.msra.mxu0 %v280
    %603 = vmatprep.subr.mxu0 %v283
    %604 = vmatpush1.msra.mxu0 %v282
    %605 = vmatprep.subr.mxu0 %v285
    %606 = vmatpush1.msra.mxu0 %v284
    %607 = vmatprep.subr.mxu0 %v287
    %608 = vmatpush1.msra.mxu0 %v286
    %609 = vmatprep.subr.mxu0 %v289
    %610 = vmatpush1.msra.mxu0 %v288
    %611 = vmatprep.subr.mxu0 %v291
    %612 = vmatpush1.msra.mxu0 %v290
    %613 = vmatprep.subr.mxu0 %v293
    %614 = vmatpush1.msra.mxu0 %v292
    %615 = vmatprep.subr.mxu0 %v295
    %616 = vmatpush1.msra.mxu0 %v294
    %617 = vmatprep.mubr.f32.mxu0 %v331
    %618 = vmatmul.mubr.f32.gmra.mrb[0].mxu0 %v329
    %v619 = vpop.f32.mrb[0].mxu0
    %v620 = vadd.f32 %v549, %v619
    %v621 = vpop.f32.mrb[0].mxu0
    %v622 = vadd.f32 %v551, %v621
    %623 = vdwg.mxu0
    %v626 = vcombine.low %v620, %v622
    %v628 = vunpack.c.l.s4 1983009808
    %v629 = vunpack.c.0.s8 %v628
    %v630 = vlaneseq
    %v631 = vshrl.u32 %v630, 7
    %v632 = vsub.s32 %v629, %v631
    %v633 = vrot.slane %v626, %v632
    %635 = vst [vmem:[#allocation7] sm:$0xf] %v633
    // Predicated region
    $region18: #{tpu_custom_call.1} parent=1 // pred_check
      _
    $region19: #{tpu_custom_call.1} parent=1 // pred_check_branch
      %637 = sbr.rel (0) target = $region21
    $region20: #{tpu_custom_call.1} parent=1 // pred_region
      %s639 = ssub.s32 64, 64
      %640 = vsyncadd [#allocation4], %s639
      %s642 = sshll.u32 [#allocation7], 4
      %s643 = int_to_ptr.vmem [resolvable:$true] %s642
      %645 = dma.vmem_to_hbm [thread:$0]  %s643, 64, %s2, [#allocation4]
    $region21: #{tpu_custom_call.1} parent=1 // pred_fallthru
      _
    // Predicated region
    $region22: #{tpu_custom_call.1} parent=1 // pred_check
      _
    $region23: #{tpu_custom_call.1} parent=1 // pred_check_branch
      %647 = sbr.rel (0) target = $region25
    $region24: #{tpu_custom_call.1} parent=1 // pred_region
      %648 = dma.done [#allocation4], 64
    $region25: #{tpu_custom_call.1} parent=1 // pred_fallthru
      _
    %649 = vsyncpa [#allocation3], 1
    %650 = vsyncpa [#allocation6], 1
    %651 = vsyncpa [#allocation4], 1

</llo_original>
